<compile_context>
chip_gen: v5e
topology: v5e:2x2
jax: 0.10.0
libtpu: 0.0.40
codegen_flags: <defaults>
</compile_context>

<pallas_src>
import jax
import jax.numpy as jnp
from jax.experimental import pallas as pl
from jax.experimental.pallas import tpu as pltpu


def _round_up(x, m):
    return (x + m - 1) // m * m


# -------------------------- Pallas kernel --------------------------------- #
def _critic_kernel(s_ref, a_ref, w1s_ref, w1a_ref, b1_ref, w2_ref, b2_ref,
                   w3_ref, b3_ref, o_ref):
    # Layer 1 (fused concat): state @ W1s + action @ W1a + b1 -> ReLU.
    # bf16 MXU operands, f32 accumulation; bias/ReLU in f32.
    s_bf = s_ref[...].astype(jnp.bfloat16)
    a_bf = a_ref[...].astype(jnp.bfloat16)
    h1 = jnp.dot(s_bf, w1s_ref[...], preferred_element_type=jnp.float32)
    h1 = h1 + jnp.dot(a_bf, w1a_ref[...], preferred_element_type=jnp.float32)
    h1 = jnp.maximum(h1 + b1_ref[...], 0.0)

    # Layer 2: (tile_b, 128) @ (128, 128) + b2 -> ReLU.
    h2 = jnp.dot(h1.astype(jnp.bfloat16), w2_ref[...],
                 preferred_element_type=jnp.float32)
    h2 = jnp.maximum(h2 + b2_ref[...], 0.0)

    # Layer 3 (transpose-free): (tile_b, 128) @ (128, 1) -> (tile_b, 1).
    q = jnp.dot(h2.astype(jnp.bfloat16), w3_ref[...],
                preferred_element_type=jnp.float32)
    o_ref[...] = (q + b3_ref[0]).astype(o_ref.dtype)


# ------------------------------ wrapper ------------------------------------ #
def critic_forward(state, action, params, *, tile_b=2048):
    """Fused Critic MLP forward pass on TPU via Pallas. Returns (B, 1)."""
    w1, b1, w2, b2, w3, b3 = params
    B, Ds = state.shape
    Da = action.shape[1]
    H = w1.shape[1]

    state = state.astype(jnp.float32)
    action = action.astype(jnp.float32)

    # Weight prep: split W1 (fused concat), cast MXU operands to bf16 once.
    w1s = w1[:Ds].astype(jnp.bfloat16)                 # (Ds, H)
    w1a = w1[Ds:].astype(jnp.bfloat16)                 # (Da, H)
    w2_bf = w2.astype(jnp.bfloat16)                    # (H, H)
    w3_col = w3.reshape(H, 1).astype(jnp.bfloat16)     # (H, 1)
    b1_f = b1.reshape(1, H).astype(jnp.float32)
    b2_f = b2.reshape(1, H).astype(jnp.float32)
    b3_s = b3.reshape(1).astype(jnp.float32)           # scalar bias -> SMEM

    # Batch tile selection:
    #  * small batch  -> one full block (rounded to a multiple of 8 sublanes)
    #  * large batch  -> multiple of 128, capped at ~half the padded batch so
    #    grid >= 2 and "parallel" shards across both v7x TensorCores.
    tile_req = max(128, (tile_b // 128) * 128)
    B_pad128 = _round_up(B, 128)
    if B_pad128 >= 256:
        half = max(128, (B_pad128 // 2) // 128 * 128)
        tile = min(tile_req, half)
    else:
        tile = _round_up(B, 8)
    B_pad = _round_up(B, tile)

    if B_pad != B:
        pad = B_pad - B
        state = jnp.pad(state, ((0, pad), (0, 0)))
        action = jnp.pad(action, ((0, pad), (0, 0)))

    grid = (B_pad // tile,)
    const = lambda i: (0, 0)  # weights/biases: same block every step -> no re-DMA

    out = pl.pallas_call(
        _critic_kernel,
        out_shape=jax.ShapeDtypeStruct((B_pad, 1), jnp.float32),
        grid_spec=pltpu.PrefetchScalarGridSpec(
            num_scalar_prefetch=0,
            grid=grid,
            in_specs=[
                pl.BlockSpec((tile, Ds), lambda i: (i, 0)),   # state tile
                pl.BlockSpec((tile, Da), lambda i: (i, 0)),   # action tile
                pl.BlockSpec((Ds, H), const),                 # W1 (state part)
                pl.BlockSpec((Da, H), const),                 # W1 (action part)
                pl.BlockSpec((1, H), const),                  # b1
                pl.BlockSpec((H, H), const),                  # W2
                pl.BlockSpec((1, H), const),                  # b2
                pl.BlockSpec((H, 1), const),                  # w3 column
                pl.BlockSpec(memory_space=pltpu.MemorySpace.SMEM),  # b3 scalar
            ],
            out_specs=pl.BlockSpec((tile, 1), lambda i: (i, 0)),
        ),
        compiler_params=pltpu.CompilerParams(
            dimension_semantics=("parallel",),
            vmem_limit_bytes=32 * 1024 * 1024,
        ),
    )(state, action, w1s, w1a, b1_f, w2_bf, b2_f, w3_col, b3_s)

    return out[:B]


# ----------------------- deterministic parameter init --------------------- #
def init_critic_params(key, state_dim, action_dim, hidden=128):
    """PyTorch-style uniform(-1/sqrt(fan_in), 1/sqrt(fan_in)) init."""
    dims = [(state_dim + action_dim, hidden), (hidden, hidden), (hidden, 1)]
    params = []
    for (fan_in, fan_out) in dims:
        key, kw, kb = jax.random.split(key, 3)
        bound = 1.0 / jnp.sqrt(float(fan_in))
        w = jax.random.uniform(kw, (fan_in, fan_out), jnp.float32, -bound, bound)
        b = jax.random.uniform(kb, (1, fan_out), jnp.float32, -bound, bound)
        params += [w, b]
    return tuple(params)


# ------------------------------- reference -------------------------------- #
def critic_ref(state, action, params):
    w1, b1, w2, b2, w3, b3 = params
    x = jnp.concatenate([state, action], axis=-1)
    h = jnp.maximum(x @ w1 + b1, 0.0)
    h = jnp.maximum(h @ w2 + b2, 0.0)
    return h @ w3 + b3


if __name__ == "__main__":
    key = jax.random.PRNGKey(0)
    k_params, k_state, k_action, k_state2, k_action2 = jax.random.split(key, 5)

    state_dim, action_dim = 12, 4
    params = init_critic_params(k_params, state_dim, action_dim)

    # bf16 MXU operands vs f32 reference -> loosened tolerances.
    ATOL, RTOL = 5e-2, 5e-2

    # Small primary test (single grid step, sublane-only tile).
    B = 8
    state = jax.random.normal(k_state, (B, state_dim), jnp.float32)
    action = jax.random.normal(k_action, (B, action_dim), jnp.float32)
    out = jax.block_until_ready(critic_forward(state, action, params))
    ref = critic_ref(state, action, params)
    assert out.shape == (B, 1), out.shape
    assert jnp.allclose(out, ref, atol=ATOL, rtol=RTOL), "mismatch vs reference (B=8)"

    # Padding + multi-tile path (B not a multiple of the tile, grid >= 2).
    B2 = 300
    state2 = jax.random.normal(k_state2, (B2, state_dim), jnp.float32)
    action2 = jax.random.normal(k_action2, (B2, action_dim), jnp.float32)
    out2 = jax.block_until_ready(critic_forward(state2, action2, params))
    ref2 = critic_ref(state2, action2, params)
    assert out2.shape == (B2, 1), out2.shape
    assert jnp.allclose(out2, ref2, atol=ATOL, rtol=RTOL), "mismatch vs reference (B=300)"

    print("KERNEL_OK")
</pallas_src>

<mosaic_0001>
module attributes {stable_mosaic.version = 11 : i64} {
  func.func @_critic_kernel(%arg0: i32, %arg1: memref<8x12xf32, #tpu.memory_space<vmem>>, %arg2: memref<8x4xf32, #tpu.memory_space<vmem>>, %arg3: memref<12x128xbf16, #tpu.memory_space<vmem>>, %arg4: memref<4x128xbf16, #tpu.memory_space<vmem>>, %arg5: memref<1x128xf32, #tpu.memory_space<vmem>>, %arg6: memref<128x128xbf16, #tpu.memory_space<vmem>>, %arg7: memref<1x128xf32, #tpu.memory_space<vmem>>, %arg8: memref<128x1xbf16, #tpu.memory_space<vmem>>, %arg9: memref<1xf32, #tpu.memory_space<smem>>, %arg10: memref<8x1xf32, #tpu.memory_space<vmem>>) attributes {dimension_semantics = [#tpu.dimension_semantics<parallel>], iteration_bounds = array<i64: 1>, scalar_prefetch = 0 : i64, scratch_operands = 0 : i64, tpu.core_type = #tpu.core_type<tc>, window_params = [{transform_indices = @transform_0, window_bounds = array<i64: 8, 12>}, {transform_indices = @transform_1, window_bounds = array<i64: 8, 4>}, {pipeline_mode = #tpu.pipeline_mode<synchronous>, transform_indices = @transform_2, window_bounds = array<i64: 12, 128>}, {pipeline_mode = #tpu.pipeline_mode<synchronous>, transform_indices = @transform_3, window_bounds = array<i64: 4, 128>}, {pipeline_mode = #tpu.pipeline_mode<synchronous>, transform_indices = @transform_4, window_bounds = array<i64: 1, 128>}, {pipeline_mode = #tpu.pipeline_mode<synchronous>, transform_indices = @transform_5, window_bounds = array<i64: 128, 128>}, {pipeline_mode = #tpu.pipeline_mode<synchronous>, transform_indices = @transform_6, window_bounds = array<i64: 1, 128>}, {pipeline_mode = #tpu.pipeline_mode<synchronous>, transform_indices = @transform_7, window_bounds = array<i64: 128, 1>}, {transform_indices = @transform_8, window_bounds = array<i64: 1>}, {transform_indices = @transform_9, window_bounds = array<i64: 8, 1>}]} {
    %c0 = arith.constant 0 : index
    %c0_0 = arith.constant 0 : index
    %0 = vector.load %arg1[%c0, %c0_0] : memref<8x12xf32, #tpu.memory_space<vmem>>, vector<8x12xf32>
    %1 = arith.truncf %0 : vector<8x12xf32> to vector<8x12xbf16>
    %c0_1 = arith.constant 0 : index
    %c0_2 = arith.constant 0 : index
    %2 = vector.load %arg2[%c0_1, %c0_2] : memref<8x4xf32, #tpu.memory_space<vmem>>, vector<8x4xf32>
    %3 = arith.truncf %2 : vector<8x4xf32> to vector<8x4xbf16>
    %c0_3 = arith.constant 0 : index
    %c0_4 = arith.constant 0 : index
    %4 = vector.load %arg3[%c0_3, %c0_4] : memref<12x128xbf16, #tpu.memory_space<vmem>>, vector<12x128xbf16>
    %cst = arith.constant dense<0.000000e+00> : vector<8x128xf32>
    %5 = tpu.matmul %1, %4, %cst {dimension_numbers = #tpu.dot_dimension_numbers<[1], [0], [0], [1], [0, 0, 1, 1], [], []>} : vector<8x12xbf16>, vector<12x128xbf16>, vector<8x128xf32> -> vector<8x128xf32>
    %c0_5 = arith.constant 0 : index
    %c0_6 = arith.constant 0 : index
    %6 = vector.load %arg4[%c0_5, %c0_6] : memref<4x128xbf16, #tpu.memory_space<vmem>>, vector<4x128xbf16>
    %cst_7 = arith.constant dense<0.000000e+00> : vector<8x128xf32>
    %7 = tpu.matmul %3, %6, %cst_7 {dimension_numbers = #tpu.dot_dimension_numbers<[1], [0], [0], [1], [0, 0, 1, 1], [], []>} : vector<8x4xbf16>, vector<4x128xbf16>, vector<8x128xf32> -> vector<8x128xf32>
    %8 = arith.addf %5, %7 : vector<8x128xf32>
    %c0_8 = arith.constant 0 : index
    %c0_9 = arith.constant 0 : index
    %9 = vector.load %arg5[%c0_8, %c0_9] : memref<1x128xf32, #tpu.memory_space<vmem>>, vector<1x128xf32>
    %10 = vector.broadcast %9 : vector<1x128xf32> to vector<8x128xf32>
    %11 = arith.addf %8, %10 : vector<8x128xf32>
    %cst_10 = arith.constant 0.000000e+00 : f32
    %12 = vector.broadcast %cst_10 : f32 to vector<8x128xf32>
    %13 = arith.maximumf %11, %12 : vector<8x128xf32>
    %14 = arith.truncf %13 : vector<8x128xf32> to vector<8x128xbf16>
    %c0_11 = arith.constant 0 : index
    %c0_12 = arith.constant 0 : index
    %15 = vector.load %arg6[%c0_11, %c0_12] : memref<128x128xbf16, #tpu.memory_space<vmem>>, vector<128x128xbf16>
    %cst_13 = arith.constant dense<0.000000e+00> : vector<8x128xf32>
    %16 = tpu.matmul %14, %15, %cst_13 {dimension_numbers = #tpu.dot_dimension_numbers<[1], [0], [0], [1], [0, 0, 1, 1], [], []>} : vector<8x128xbf16>, vector<128x128xbf16>, vector<8x128xf32> -> vector<8x128xf32>
    %c0_14 = arith.constant 0 : index
    %c0_15 = arith.constant 0 : index
    %17 = vector.load %arg7[%c0_14, %c0_15] : memref<1x128xf32, #tpu.memory_space<vmem>>, vector<1x128xf32>
    %18 = vector.broadcast %17 : vector<1x128xf32> to vector<8x128xf32>
    %19 = arith.addf %16, %18 : vector<8x128xf32>
    %cst_16 = arith.constant 0.000000e+00 : f32
    %20 = vector.broadcast %cst_16 : f32 to vector<8x128xf32>
    %21 = arith.maximumf %19, %20 : vector<8x128xf32>
    %22 = arith.truncf %21 : vector<8x128xf32> to vector<8x128xbf16>
    %c0_17 = arith.constant 0 : index
    %c0_18 = arith.constant 0 : index
    %23 = vector.load %arg8[%c0_17, %c0_18] : memref<128x1xbf16, #tpu.memory_space<vmem>>, vector<128x1xbf16>
    %cst_19 = arith.constant dense<0.000000e+00> : vector<8x1xf32>
    %24 = tpu.matmul %22, %23, %cst_19 {dimension_numbers = #tpu.dot_dimension_numbers<[1], [0], [0], [1], [0, 0, 1, 1], [], []>} : vector<8x128xbf16>, vector<128x1xbf16>, vector<8x1xf32> -> vector<8x1xf32>
    %c0_20 = arith.constant 0 : index
    %25 = memref.load %arg9[%c0_20] : memref<1xf32, #tpu.memory_space<smem>>
    %26 = vector.broadcast %25 : f32 to vector<8x1xf32>
    %27 = arith.addf %24, %26 : vector<8x1xf32>
    %c0_21 = arith.constant 0 : index
    %c0_22 = arith.constant 0 : index
    %28 = vector.load %arg10[%c0_21, %c0_22] : memref<8x1xf32, #tpu.memory_space<vmem>>, vector<8x1xf32>
    tpu.vector_store %arg10[%c0_21, %c0_22], %27 {strides = array<i32>} : memref<8x1xf32, #tpu.memory_space<vmem>>, vector<8x1xf32>,
    return
  }
  func.func @transform_0(%arg0: i32) -> (i32, i32) {
    %c0_i32 = arith.constant 0 : i32
    %c0_i32_0 = arith.constant 0 : i32
    return %arg0, %c0_i32 : i32, i32
  }
  func.func @transform_1(%arg0: i32) -> (i32, i32) {
    %c0_i32 = arith.constant 0 : i32
    %c0_i32_0 = arith.constant 0 : i32
    return %arg0, %c0_i32 : i32, i32
  }
  func.func @transform_2(%arg0: i32) -> (i32, i32) {
    %c0_i32 = arith.constant 0 : i32
    %c0_i32_0 = arith.constant 0 : i32
    %c0_i32_1 = arith.constant 0 : i32
    return %c0_i32, %c0_i32_0 : i32, i32
  }
  func.func @transform_3(%arg0: i32) -> (i32, i32) {
    %c0_i32 = arith.constant 0 : i32
    %c0_i32_0 = arith.constant 0 : i32
    %c0_i32_1 = arith.constant 0 : i32
    return %c0_i32, %c0_i32_0 : i32, i32
  }
  func.func @transform_4(%arg0: i32) -> (i32, i32) {
    %c0_i32 = arith.constant 0 : i32
    %c0_i32_0 = arith.constant 0 : i32
    %c0_i32_1 = arith.constant 0 : i32
    return %c0_i32, %c0_i32_0 : i32, i32
  }
  func.func @transform_5(%arg0: i32) -> (i32, i32) {
    %c0_i32 = arith.constant 0 : i32
    %c0_i32_0 = arith.constant 0 : i32
    %c0_i32_1 = arith.constant 0 : i32
    return %c0_i32, %c0_i32_0 : i32, i32
  }
  func.func @transform_6(%arg0: i32) -> (i32, i32) {
    %c0_i32 = arith.constant 0 : i32
    %c0_i32_0 = arith.constant 0 : i32
    %c0_i32_1 = arith.constant 0 : i32
    return %c0_i32, %c0_i32_0 : i32, i32
  }
  func.func @transform_7(%arg0: i32) -> (i32, i32) {
    %c0_i32 = arith.constant 0 : i32
    %c0_i32_0 = arith.constant 0 : i32
    %c0_i32_1 = arith.constant 0 : i32
    return %c0_i32, %c0_i32_0 : i32, i32
  }
  func.func @transform_8(%arg0: i32) -> i32 {
    %c0_i32 = arith.constant 0 : i32
    %c0_i32_0 = arith.constant 0 : i32
    return %c0_i32 : i32
  }
  func.func @transform_9(%arg0: i32) -> (i32, i32) {
    %c0_i32 = arith.constant 0 : i32
    %c0_i32_0 = arith.constant 0 : i32
    return %arg0, %c0_i32 : i32, i32
  }
}

</mosaic_0001>

<llo_original>
// kernel: tpu_custom_call.1
$region0: #{tpu_custom_call.1}
  #allocation0 [shape = 'u32[]', space=smem, size = 0x4, offset = 0x4, fixed_abs, tag = 'smem constant byte address 0x4 - core index']
  #allocation1 [shape = 'u32[72,128]{1,0:T(1,128)}', space=vmem, size = 0x9000, scoped, tag = 'internal scratch']
  #allocation2 [shape = 'f32[1]{0:T(128)S(6)}', space=smem, size = 0x200, scoped, tag = 'scoped memory for tpu_custom_call.1']
  %s0 = inlined_call_operand.vmem [shape: f32[8,12], index: 0, kind: input, shape index: {}]
  %s1 = inlined_call_operand.vmem [shape: f32[8,4], index: 1, kind: input, shape index: {}]
  %s2 = inlined_call_operand.hbm [shape: bf16[12,128], index: 2, kind: input, shape index: {}]
  %s3 = inlined_call_operand.vmem [shape: bf16[4,128], index: 3, kind: input, shape index: {}]
  %s4 = inlined_call_operand.vmem [shape: f32[1,128], index: 4, kind: input, shape index: {}]
  %s5 = inlined_call_operand.vmem [shape: bf16[128,128], index: 5, kind: input, shape index: {}]
  %s6 = inlined_call_operand.vmem [shape: f32[1,128], index: 6, kind: input, shape index: {}]
  %s7 = inlined_call_operand.vmem [shape: bf16[128,1], index: 7, kind: input, shape index: {}]
  %s8 = inlined_call_operand.<no memory space> [shape: f32[1], index: 8, kind: input, shape index: {}]
  %s9 = inlined_call_operand.vmem [shape: f32[8,1], index: 9, kind: output, shape index: {}]
  %s10 = sld [smem:[#allocation0]]
  $region50: #{tpu_custom_call.1} parent=0
    _
  %s12 = ssub.s32 1, %s10
  %s13 = scalar_select 0, %s12, %s10
  %14 = sst [smem:[#allocation2]] %s8
  $region1: #{tpu_custom_call.1} parent=0
    #allocation3 [shape = 'u8[4096]{0}', space=vmem, size = 0x1000, scoped, tag = 'input window, operand 2, single buffered']
    #allocation4 [shape = 's32[1]{0}', space=sflag, size = 0x4, scoped, tag = 'scoped memory for tpu_custom_call.1']
    %15 = vsyncpa [#allocation4], 0
    // Predicated region
    $region2: #{tpu_custom_call.1} parent=1 // pred_check
      _
    $region3: #{tpu_custom_call.1} parent=1 // pred_check_branch
      %17 = sbr.rel (0) target = $region5
    $region4: #{tpu_custom_call.1} parent=1 // pred_region
      _
    $region5: #{tpu_custom_call.1} parent=1 // pred_fallthru
      _
    // Predicated region
    $region6: #{tpu_custom_call.1} parent=1 // pred_check
      _
    $region7: #{tpu_custom_call.1} parent=1 // pred_check_branch
      %19 = sbr.rel (0) target = $region9
    $region8: #{tpu_custom_call.1} parent=1 // pred_region
      _
    $region9: #{tpu_custom_call.1} parent=1 // pred_fallthru
      _
    // Predicated region
    $region10: #{tpu_custom_call.1} parent=1 // pred_check
      _
    $region11: #{tpu_custom_call.1} parent=1 // pred_check_branch
      %21 = sbr.rel (0) target = $region13
    $region12: #{tpu_custom_call.1} parent=1 // pred_region
      %23 = vsyncadd [#allocation4], 0
      %s24 = sshll.u32 %s2, 4
      %s25 = int_to_ptr.hbm [resolvable:$true] %s24
      %s26 = sshll.u32 [#allocation3], 4
      %s27 = int_to_ptr.vmem [resolvable:$true] %s26
      %32 = dma.hbm_to_vmem [thread:$0]  %s25, 128, %s27, [#allocation4], 64, 64, 4
    $region13: #{tpu_custom_call.1} parent=1 // pred_fallthru
      _
    // Predicated region
    $region14: #{tpu_custom_call.1} parent=1 // pred_check
      _
    $region15: #{tpu_custom_call.1} parent=1 // pred_check_branch
      %34 = sbr.rel (0) target = $region17
    $region16: #{tpu_custom_call.1} parent=1 // pred_region
      _
    $region17: #{tpu_custom_call.1} parent=1 // pred_fallthru
      _
    // Predicated region
    $region18: #{tpu_custom_call.1} parent=1 // pred_check
      _
    $region19: #{tpu_custom_call.1} parent=1 // pred_check_branch
      %36 = sbr.rel (0) target = $region21
    $region20: #{tpu_custom_call.1} parent=1 // pred_region
      _
    $region21: #{tpu_custom_call.1} parent=1 // pred_fallthru
      _
    // Predicated region
    $region22: #{tpu_custom_call.1} parent=1 // pred_check
      _
    $region23: #{tpu_custom_call.1} parent=1 // pred_check_branch
      %38 = sbr.rel (0) target = $region25
    $region24: #{tpu_custom_call.1} parent=1 // pred_region
      _
    $region25: #{tpu_custom_call.1} parent=1 // pred_fallthru
      _
    // Predicated region
    $region26: #{tpu_custom_call.1} parent=1 // pred_check
      _
    $region27: #{tpu_custom_call.1} parent=1 // pred_check_branch
      %40 = sbr.rel (0) target = $region29
    $region28: #{tpu_custom_call.1} parent=1 // pred_region
      _
    $region29: #{tpu_custom_call.1} parent=1 // pred_fallthru
      _
    // Predicated region
    $region30: #{tpu_custom_call.1} parent=1 // pred_check
      _
    $region31: #{tpu_custom_call.1} parent=1 // pred_check_branch
      %42 = sbr.rel (0) target = $region33
    $region32: #{tpu_custom_call.1} parent=1 // pred_region
      _
    $region33: #{tpu_custom_call.1} parent=1 // pred_fallthru
      _
    // Predicated region
    $region34: #{tpu_custom_call.1} parent=1 // pred_check
      _
    $region35: #{tpu_custom_call.1} parent=1 // pred_check_branch
      %44 = sbr.rel (0) target = $region37
    $region36: #{tpu_custom_call.1} parent=1 // pred_region
      _
    $region37: #{tpu_custom_call.1} parent=1 // pred_fallthru
      _
    // Predicated region
    $region38: #{tpu_custom_call.1} parent=1 // pred_check
      _
    $region39: #{tpu_custom_call.1} parent=1 // pred_check_branch
      %46 = sbr.rel (0) target = $region41
    $region40: #{tpu_custom_call.1} parent=1 // pred_region
      %48 = dma.done [#allocation4], 128
    $region41: #{tpu_custom_call.1} parent=1 // pred_fallthru
      _
    %v50 = vld [vmem:[%s0] sm:$0xff]
    %v51 = vpack.c.bf16 %v50, %v50
    %v52 = vld [vmem:[%s1] sm:$0xff]
    %v53 = vpack.c.bf16 %v52, %v52
    %v54 = vld [vmem:[#allocation3] sm:$0xf]
    %v55 = vld [vmem:[#allocation3 + $0x4] sm:$0x3]
    %v56 = vld [vmem:[%s3] sm:$0x3]
    %vm57 = vcmask 31744
    %v59 = vsel %vm57, %v53, 0
    %vm61 = vcmask 1041408
    %v63 = vsel %vm61, %v56, 0
    %65 = vmatpush.bf16.msra.mxu0 0
    %66 = vmatpush.bf16.msra.mxu0 0
    %67 = vmatpush.bf16.msra.mxu0 0
    %68 = vmatpush.bf16.msra.mxu0 0
    %69 = vmatpush.bf16.msra.mxu0 0
    %70 = vmatpush.bf16.msra.mxu0 0
    %71 = vmatpush.bf16.msra.mxu0 0
    %72 = vmatpush.bf16.msra.mxu0 %v63
    %73 = vmatmul.bf16.gmra.mxu0 %v59
    %v74 = vpop.f32.mrf.mxu0
    %v75 = vadd.f32 0.0, %v74
    %v76 = vpop.f32.mrf.mxu0
    %77 = vdwg.mxu0
    %v80 = vunpack.c.l.b16 %v54
    %v81 = vunpack.c.l.b16 %v55
    %v82 = vpack.c.b16 %v81, %v80
    %vm83 = vcmask 97280
    %v85 = vsel %vm83, %v51, 0
    %vm87 = vcmask 1045504
    %v89 = vsel %vm87, %v82, 0
    %91 = vmatpush.bf16.msra.mxu0 0
    %92 = vmatpush.bf16.msra.mxu0 0
    %93 = vmatpush.bf16.msra.mxu0 0
    %94 = vmatpush.bf16.msra.mxu0 0
    %95 = vmatpush.bf16.msra.mxu0 0
    %96 = vmatpush.bf16.msra.mxu0 0
    %97 = vmatpush.bf16.msra.mxu0 0
    %98 = vmatpush.bf16.msra.mxu0 %v89
    %99 = vmatmul.bf16.gmra.mxu0 %v85
    %v100 = vpop.f32.mrf.mxu0
    %v101 = vadd.f32 %v75, %v100
    %v102 = vpop.f32.mrf.mxu0
    %103 = vdwg.mxu0
    %v104 = vld [vmem:[%s4] sm:$0x1]
    %v106 = vperm.slane %v104, 0
    %v108 = vadd.f32 %v101, %v106
    %v109 = vmax.f32 %v108, 0.0
    %v110 = vpack.c.bf16 %v109, %v109
    %v111 = vld [vmem:[%s5] sm:$0xf]
    %v112 = vld [vmem:[%s5 + $0x4] sm:$0xf]
    %v113 = vld [vmem:[%s5 + $0x8] sm:$0xf]
    %v114 = vld [vmem:[%s5 + $0xc] sm:$0xf]
    %v115 = vld [vmem:[%s5 + $0x10] sm:$0xf]
    %v116 = vld [vmem:[%s5 + $0x14] sm:$0xf]
    %v117 = vld [vmem:[%s5 + $0x18] sm:$0xf]
    %v118 = vld [vmem:[%s5 + $0x1c] sm:$0xf]
    %v119 = vld [vmem:[%s5 + $0x20] sm:$0xf]
    %v120 = vld [vmem:[%s5 + $0x24] sm:$0xf]
    %v121 = vld [vmem:[%s5 + $0x28] sm:$0xf]
    %v122 = vld [vmem:[%s5 + $0x2c] sm:$0xf]
    %v123 = vld [vmem:[%s5 + $0x30] sm:$0xf]
    %v124 = vld [vmem:[%s5 + $0x34] sm:$0xf]
    %v125 = vld [vmem:[%s5 + $0x38] sm:$0xf]
    %v126 = vld [vmem:[%s5 + $0x3c] sm:$0xf]
    %v127 = vld [vmem:[%s6] sm:$0x1]
    %v129 = vperm.slane %v127, 0
    %v147 = vunpack.c.l.b16 %v111
    %v148 = vunpack.c.l.b16 %v112
    %v149 = vunpack.c.l.b16 %v113
    %v150 = vunpack.c.l.b16 %v114
    %v151 = vunpack.c.l.b16 %v115
    %v152 = vunpack.c.l.b16 %v116
    %v153 = vunpack.c.l.b16 %v117
    %v154 = vunpack.c.l.b16 %v118
    %v155 = vunpack.c.l.b16 %v119
    %v156 = vunpack.c.l.b16 %v120
    %v157 = vunpack.c.l.b16 %v121
    %v158 = vunpack.c.l.b16 %v122
    %v159 = vunpack.c.l.b16 %v123
    %v160 = vunpack.c.l.b16 %v124
    %v161 = vunpack.c.l.b16 %v125
    %v162 = vunpack.c.l.b16 %v126
    %v163 = vpack.c.b16 %v148, %v147
    %v164 = vpack.c.b16 %v150, %v149
    %v165 = vpack.c.b16 %v152, %v151
    %v166 = vpack.c.b16 %v154, %v153
    %v167 = vpack.c.b16 %v156, %v155
    %v168 = vpack.c.b16 %v158, %v157
    %v169 = vpack.c.b16 %v160, %v159
    %v170 = vpack.c.b16 %v162, %v161
    %179 = vmatpush.bf16.msra.mxu0 %v170
    %180 = vmatpush.bf16.msra.mxu0 %v169
    %181 = vmatpush.bf16.msra.mxu0 %v168
    %182 = vmatpush.bf16.msra.mxu0 %v167
    %183 = vmatpush.bf16.msra.mxu0 %v166
    %184 = vmatpush.bf16.msra.mxu0 %v165
    %185 = vmatpush.bf16.msra.mxu0 %v164
    %186 = vmatpush.bf16.msra.mxu0 %v163
    %187 = vmatmul.bf16.gmra.mxu0 %v110
    %v188 = vpop.f32.mrf.mxu0
    %v189 = vadd.f32 %v129, %v188
    %v190 = vpop.f32.mrf.mxu0
    %191 = vdwg.mxu0
    %v192 = vmax.f32 %v189, 0.0
    %v193 = vpack.c.bf16 %v192, %v192
    %v194 = vld [vmem:[%s7] sm:$0xf]
    %v195 = vld [vmem:[%s7 + $0x4] sm:$0xf]
    %v196 = vld [vmem:[%s7 + $0x8] sm:$0xf]
    %v197 = vld [vmem:[%s7 + $0xc] sm:$0xf]
    %v198 = vld [vmem:[%s7 + $0x10] sm:$0xf]
    %v199 = vld [vmem:[%s7 + $0x14] sm:$0xf]
    %v200 = vld [vmem:[%s7 + $0x18] sm:$0xf]
    %v201 = vld [vmem:[%s7 + $0x1c] sm:$0xf]
    %v202 = vld [vmem:[%s7 + $0x20] sm:$0xf]
    %v203 = vld [vmem:[%s7 + $0x24] sm:$0xf]
    %v204 = vld [vmem:[%s7 + $0x28] sm:$0xf]
    %v205 = vld [vmem:[%s7 + $0x2c] sm:$0xf]
    %v206 = vld [vmem:[%s7 + $0x30] sm:$0xf]
    %v207 = vld [vmem:[%s7 + $0x34] sm:$0xf]
    %v208 = vld [vmem:[%s7 + $0x38] sm:$0xf]
    %v209 = vld [vmem:[%s7 + $0x3c] sm:$0xf]
    %s210 = sld [smem:[#allocation2]]
    %v211 = vstv %s210
    %v228 = vunpack.c.l.b16 %v194
    %v229 = vunpack.c.l.b16 %v195
    %v230 = vunpack.c.l.b16 %v196
    %v231 = vunpack.c.l.b16 %v197
    %v232 = vunpack.c.l.b16 %v198
    %v233 = vunpack.c.l.b16 %v199
    %v234 = vunpack.c.l.b16 %v200
    %v235 = vunpack.c.l.b16 %v201
    %v236 = vunpack.c.l.b16 %v202
    %v237 = vunpack.c.l.b16 %v203
    %v238 = vunpack.c.l.b16 %v204
    %v239 = vunpack.c.l.b16 %v205
    %v240 = vunpack.c.l.b16 %v206
    %v241 = vunpack.c.l.b16 %v207
    %v242 = vunpack.c.l.b16 %v208
    %v243 = vunpack.c.l.b16 %v209
    %v244 = vpack.c.b16 %v229, %v228
    %v245 = vpack.c.b16 %v231, %v230
    %v246 = vpack.c.b16 %v233, %v232
    %v247 = vpack.c.b16 %v235, %v234
    %v248 = vpack.c.b16 %v237, %v236
    %v249 = vpack.c.b16 %v239, %v238
    %v250 = vpack.c.b16 %v241, %v240
    %v251 = vpack.c.b16 %v243, %v242
    %260 = vmatpush.bf16.msra.mxu0 %v251
    %261 = vmatpush.bf16.msra.mxu0 %v250
    %262 = vmatpush.bf16.msra.mxu0 %v249
    %263 = vmatpush.bf16.msra.mxu0 %v248
    %264 = vmatpush.bf16.msra.mxu0 %v247
    %265 = vmatpush.bf16.msra.mxu0 %v246
    %266 = vmatpush.bf16.msra.mxu0 %v245
    %267 = vmatpush.bf16.msra.mxu0 %v244
    %268 = vmatmul.bf16.gmra.mxu0 %v193
    %v269 = vpop.f32.mrf.mxu0
    %v270 = vadd.f32 %v211, %v269
    %v271 = vpop.f32.mrf.mxu0
    %272 = vdwg.mxu0
    %vm273 = vcmask 7168
    %274 = vst.msk [vmem:[%s9] sm:$0xff] %vm273, %v270
    // Predicated region
    $region42: #{tpu_custom_call.1} parent=1 // pred_check
      _
    $region43: #{tpu_custom_call.1} parent=1 // pred_check_branch
      %276 = sbr.rel (0) target = $region45
    $region44: #{tpu_custom_call.1} parent=1 // pred_region
      _
    $region45: #{tpu_custom_call.1} parent=1 // pred_fallthru
      _
    // Predicated region
    $region46: #{tpu_custom_call.1} parent=1 // pred_check
      _
    $region47: #{tpu_custom_call.1} parent=1 // pred_check_branch
      %278 = sbr.rel (0) target = $region49
    $region48: #{tpu_custom_call.1} parent=1 // pred_region
      _
    $region49: #{tpu_custom_call.1} parent=1 // pred_fallthru
      _
    %279 = vsyncpa [#allocation4], 1

</llo_original>
